<compile_context>
chip_gen: v5e
topology: v5e:2x2
jax: 0.10.0
libtpu: 0.0.40
codegen_flags: <defaults>
</compile_context>

<pallas_src>
import functools

import jax
import jax.numpy as jnp
from jax.experimental import pallas as pl
from jax.experimental.pallas import tpu as pltpu


_ACTIVATIONS = {
    "relu": lambda x: jnp.maximum(x, 0.0),
    "gelu": jax.nn.gelu,          # tanh-approximate by default: 1 transcendental/elem
    "silu": jax.nn.silu,
    "sigmoid": jax.nn.sigmoid,
    "tanh": jnp.tanh,
}
_TRANSCENDENTAL = {"gelu", "silu", "sigmoid", "tanh"}


# ---------------------------------------------------------------------------
# Pallas kernel: activation + per-(batch,channel)-row {0,1} scale.
#   w_ref : (TR, 1)   pre-binarized weight rows, f32
#   x_ref : (TR, TS)  sublane x lane dense tile of x
#   o_ref : (TR, TS)
# ---------------------------------------------------------------------------
def _scaled_conv3d_kernel(w_ref, x_ref, o_ref, *, act_fn):
    xa = act_fn(x_ref[...].astype(jnp.float32))          # activation in f32 (free: mem-bound)
    o_ref[...] = (xa * w_ref[...]).astype(o_ref.dtype)   # (TR,1) broadcasts along lanes for free


def _vmem_capacity_bytes():
    """Per-generation VMEM capacity; conservative fallback works on every chip."""
    try:
        cap = getattr(pltpu.get_tpu_info(), "vmem_capacity_bytes", None)
        if cap:
            return int(cap)
    except Exception:
        pass
    return 64 * 1024 * 1024       # v7x per-TensorCore VMEM (smallest current generation)


def _pick_tiles(R, Sp, itemsize, target_bytes):
    """Byte-based tile selection: rows a multiple of 8 (or full R), lanes a multiple of 128."""
    if R % 8 != 0:
        # Full-extent row block is always layout-legal; realistic N*C is a multiple of 8.
        row_t = R
    else:
        # Cap rows so even a minimum 128-lane column stays under the byte budget.
        max_rows = max(8, (target_bytes // (128 * itemsize)) // 8 * 8)
        row_t = min(R, max_rows)
    ts = max(128, (target_bytes // (row_t * itemsize)) // 128 * 128)
    ts = min(ts, Sp)
    return row_t, ts


def scaled_conv3d(x, weight, node="relu", tile_rows=None, tile_s=None):
    """x: (N, C, D, H, W); weight: (C, 1, 1, 1, 1) raw BinaryConv3d weight."""
    N, C, D, H, W = x.shape
    S = D * H * W
    R = N * C
    itemsize = jnp.dtype(x.dtype).itemsize
    act_fn = _ACTIVATIONS[node]

    # 2-D layout: rows = batch*channel (sublanes), spatial = lanes (padded to 128 multiple).
    Sp = pl.cdiv(S, 128) * 128
    x2 = x.reshape(R, S)
    if Sp != S:
        x2 = jnp.pad(x2, ((0, 0), (0, Sp - S)))

    # Hoist binarization out of the kernel; expand per (n, c) row -> (R, 1) f32 in {0, 1}.
    w_bin = (weight.reshape(C) > 0.5).astype(jnp.float32)
    w_rows = jnp.tile(w_bin, N).reshape(R, 1)

    # Byte-based tiles + per-generation VMEM budget (respects v7x's 64 MiB per TensorCore).
    cap = _vmem_capacity_bytes()
    budget = int(cap * 0.6)                                  # headroom for scratch / misc
    target_tile_bytes = min(4 << 20, max(512 << 10, budget // 4))
    auto_rt, auto_ts = _pick_tiles(R, Sp, itemsize, target_tile_bytes)
    row_t = tile_rows if tile_rows is not None else auto_rt
    ts = tile_s if tile_s is not None else auto_ts
    assert row_t == R or row_t % 8 == 0, "row tile must be a multiple of 8 (or full R)"
    assert ts == Sp or ts % 128 == 0, "spatial tile must be a multiple of 128 (or full Sp)"

    grid = (pl.cdiv(R, row_t), pl.cdiv(Sp, ts))

    # VMEM limit: 2-deep pipeline on input + output tiles (weight block negligible) + margin.
    tile_bytes = row_t * ts * itemsize
    vmem_limit = min(max(4 * tile_bytes + (2 << 20), 32 << 20), int(cap * 0.75))

    elems = R * S
    cost = pl.CostEstimate(
        flops=2 * elems,
        transcendentals=elems if node in _TRANSCENDENTAL else 0,
        bytes_accessed=2 * elems * itemsize,
    )

    out = pl.pallas_call(
        functools.partial(_scaled_conv3d_kernel, act_fn=act_fn),
        out_shape=jax.ShapeDtypeStruct((R, Sp), x.dtype),
        grid=grid,
        in_specs=[
            pl.BlockSpec((row_t, 1), lambda r, s: (r, 0)),    # weight rows (sublane aligned)
            pl.BlockSpec((row_t, ts), lambda r, s: (r, s)),   # lane-dense x tile
        ],
        out_specs=pl.BlockSpec((row_t, ts), lambda r, s: (r, s)),
        compiler_params=pltpu.CompilerParams(
            dimension_semantics=("parallel", "parallel"),
            vmem_limit_bytes=vmem_limit),
        cost_estimate=cost,
    )(w_rows, x2)

    if Sp != S:
        out = out[:, :S]
    return out.reshape(N, C, D, H, W)


def scaled_conv3d_ref(x, weight, node="relu"):
    """Pure-JAX reference of the PyTorch forward (f32 compute, cast back to x dtype)."""
    act_fn = _ACTIVATIONS[node]
    C = x.shape[1]
    binary_w = (weight.reshape(C) > 0.5).astype(jnp.float32)
    xa = act_fn(x.astype(jnp.float32))
    return (xa * binary_w[None, :, None, None, None]).astype(x.dtype)


if __name__ == "__main__":
    key = jax.random.PRNGKey(0)
    k1, k2, k3 = jax.random.split(key, 3)

    # --- Test 1: f32 relu, default BinaryConv3d init (weight = 1.0), auto byte-based tiles ---
    N, C, D, H, W = 2, 8, 4, 8, 16                  # S = 512, R = 16
    x = jax.random.normal(k1, (N, C, D, H, W), dtype=jnp.float32)
    weight = jnp.ones((C, 1, 1, 1, 1), dtype=jnp.float32)
    y = jax.block_until_ready(scaled_conv3d(x, weight, node="relu"))
    assert y.shape == (N, C, D, H, W)
    assert jnp.allclose(y, scaled_conv3d_ref(x, weight, "relu"), atol=1e-6, rtol=1e-6)

    # --- Test 2: random weights (binarization) + forced small tiles -> multi-step (2, 4) grid ---
    w2 = jax.random.uniform(k2, (C, 1, 1, 1, 1), dtype=jnp.float32)
    y2 = jax.block_until_ready(scaled_conv3d(x, w2, node="relu", tile_rows=8, tile_s=128))
    assert jnp.allclose(y2, scaled_conv3d_ref(x, w2, "relu"), atol=1e-6, rtol=1e-6)

    # --- Test 3: bf16 end-to-end with a transcendental activation (f32 internal compute) ---
    xb = x.astype(jnp.bfloat16)
    y3 = jax.block_until_ready(scaled_conv3d(xb, w2, node="gelu"))
    y3_ref = scaled_conv3d_ref(xb, w2, "gelu")
    assert jnp.allclose(y3.astype(jnp.float32), y3_ref.astype(jnp.float32),
                        atol=2e-2, rtol=2e-2), "bf16 gelu mismatch"

    # --- Test 4: spatial size not a multiple of 128 (lane-padding path) + R not a multiple of 8 ---
    x4 = jax.random.normal(k3, (1, 4, 3, 5, 7), dtype=jnp.float32)   # S = 105, R = 4
    w4 = jax.random.uniform(k2, (4, 1, 1, 1, 1), dtype=jnp.float32)
    y4 = jax.block_until_ready(scaled_conv3d(x4, w4, node="sigmoid"))
    assert jnp.allclose(y4, scaled_conv3d_ref(x4, w4, "sigmoid"), atol=1e-6, rtol=1e-6)

    print("KERNEL_OK")
</pallas_src>

<mosaic_0001>
module attributes {stable_mosaic.version = 11 : i64} {
  func.func @_scaled_conv3d_kernel(%arg0: i32, %arg1: i32, %arg2: memref<16x1xf32, #tpu.memory_space<vmem>>, %arg3: memref<16x512xf32, #tpu.memory_space<vmem>>, %arg4: memref<16x512xf32, #tpu.memory_space<vmem>>) attributes {dimension_semantics = [#tpu.dimension_semantics<parallel>, #tpu.dimension_semantics<parallel>], iteration_bounds = array<i64: 1, 1>, scalar_prefetch = 0 : i64, scratch_operands = 0 : i64, tpu.core_type = #tpu.core_type<tc>, window_params = [{transform_indices = @transform_0, window_bounds = array<i64: 16, 1>}, {transform_indices = @transform_1, window_bounds = array<i64: 16, 512>}, {transform_indices = @transform_2, window_bounds = array<i64: 16, 512>}]} {
    %c0 = arith.constant 0 : index
    %c0_0 = arith.constant 0 : index
    %0 = vector.load %arg3[%c0, %c0_0] : memref<16x512xf32, #tpu.memory_space<vmem>>, vector<16x512xf32>
    %cst = arith.constant 0.000000e+00 : f32
    %1 = vector.broadcast %cst : f32 to vector<16x512xf32>
    %2 = arith.maximumf %0, %1 : vector<16x512xf32>
    %c0_1 = arith.constant 0 : index
    %c0_2 = arith.constant 0 : index
    %3 = vector.load %arg2[%c0_1, %c0_2] : memref<16x1xf32, #tpu.memory_space<vmem>>, vector<16x1xf32>
    %4 = vector.broadcast %3 : vector<16x1xf32> to vector<16x512xf32>
    %5 = arith.mulf %2, %4 : vector<16x512xf32>
    %c0_3 = arith.constant 0 : index
    %c0_4 = arith.constant 0 : index
    %6 = vector.load %arg4[%c0_3, %c0_4] : memref<16x512xf32, #tpu.memory_space<vmem>>, vector<16x512xf32>
    tpu.vector_store %arg4[%c0_3, %c0_4], %5 {strides = array<i32>} : memref<16x512xf32, #tpu.memory_space<vmem>>, vector<16x512xf32>,
    return
  }
  func.func @transform_0(%arg0: i32, %arg1: i32) -> (i32, i32) {
    %c0_i32 = arith.constant 0 : i32
    %c0_i32_0 = arith.constant 0 : i32
    return %arg0, %c0_i32 : i32, i32
  }
  func.func @transform_1(%arg0: i32, %arg1: i32) -> (i32, i32) {
    %c0_i32 = arith.constant 0 : i32
    return %arg0, %arg1 : i32, i32
  }
  func.func @transform_2(%arg0: i32, %arg1: i32) -> (i32, i32) {
    %c0_i32 = arith.constant 0 : i32
    return %arg0, %arg1 : i32, i32
  }
}

</mosaic_0001>

<llo_original>
// kernel: tpu_custom_call.1
$region0: #{tpu_custom_call.1}
  #allocation0 [shape = 'u32[]', space=smem, size = 0x4, offset = 0x4, fixed_abs, tag = 'smem constant byte address 0x4 - core index']
  #allocation1 [shape = 'u32[72,128]{1,0:T(1,128)}', space=vmem, size = 0x9000, scoped, tag = 'internal scratch']
  %s0 = inlined_call_operand.vmem [shape: f32[16,1], index: 0, kind: input, shape index: {}]
  %s1 = inlined_call_operand.hbm [shape: f32[16,512], index: 1, kind: input, shape index: {}]
  %s2 = inlined_call_operand.hbm [shape: f32[16,512], index: 2, kind: output, shape index: {}]
  %s3 = sld [smem:[#allocation0]]
  $region22: #{tpu_custom_call.1} parent=0
    _
  %s5 = ssub.s32 1, %s3
  %s6 = scalar_select 0, %s5, %s3
  $region1: #{tpu_custom_call.1} parent=0
    #allocation2 [shape = 'u8[32768]{0}', space=vmem, size = 0x8000, scoped, tag = 'input window, operand 1, single buffered']
    #allocation3 [shape = 's32[1]{0}', space=sflag, size = 0x4, scoped, tag = 'scoped memory for tpu_custom_call.1']
    #allocation4 [shape = 's32[1]{0}', space=sflag, size = 0x4, scoped, tag = 'scoped memory for tpu_custom_call.1']
    #allocation5 [shape = 'u8[32768]{0}', space=vmem, size = 0x8000, scoped, tag = 'output window, operand 0, single buffered']
    %7 = vsyncpa [#allocation3], 0
    %8 = vsyncpa [#allocation4], 0
    // Predicated region
    $region2: #{tpu_custom_call.1} parent=1 // pred_check
      _
    $region3: #{tpu_custom_call.1} parent=1 // pred_check_branch
      %10 = sbr.rel (0) target = $region5
    $region4: #{tpu_custom_call.1} parent=1 // pred_region
      _
    $region5: #{tpu_custom_call.1} parent=1 // pred_fallthru
      _
    // Predicated region
    $region6: #{tpu_custom_call.1} parent=1 // pred_check
      _
    $region7: #{tpu_custom_call.1} parent=1 // pred_check_branch
      %12 = sbr.rel (0) target = $region9
    $region8: #{tpu_custom_call.1} parent=1 // pred_region
      %14 = vsyncadd [#allocation3], 0
      %s15 = sshll.u32 %s1, 4
      %s16 = int_to_ptr.hbm [resolvable:$true] %s15
      %s17 = sshll.u32 [#allocation2], 4
      %s18 = int_to_ptr.vmem [resolvable:$true] %s17
      %23 = dma.hbm_to_vmem [thread:$0]  %s16, 1024, %s18, [#allocation3], 512, 512, 32
    $region9: #{tpu_custom_call.1} parent=1 // pred_fallthru
      _
    // Predicated region
    $region10: #{tpu_custom_call.1} parent=1 // pred_check
      _
    $region11: #{tpu_custom_call.1} parent=1 // pred_check_branch
      %25 = sbr.rel (0) target = $region13
    $region12: #{tpu_custom_call.1} parent=1 // pred_region
      %27 = dma.done [#allocation3], 1024
    $region13: #{tpu_custom_call.1} parent=1 // pred_fallthru
      _
    %v28 = vld [vmem:[#allocation2] sm:$0xff]
    %v29 = vld [vmem:[#allocation2 + $0x8] sm:$0xff]
    %v30 = vld [vmem:[#allocation2 + $0x10] sm:$0xff]
    %v31 = vld [vmem:[#allocation2 + $0x18] sm:$0xff]
    %v32 = vld [vmem:[#allocation2 + $0x20] sm:$0xff]
    %v33 = vld [vmem:[#allocation2 + $0x28] sm:$0xff]
    %v34 = vld [vmem:[#allocation2 + $0x30] sm:$0xff]
    %v35 = vld [vmem:[#allocation2 + $0x38] sm:$0xff]
    %v36 = vmax.f32 %v28, 0.0
    %v37 = vmax.f32 %v29, 0.0
    %v38 = vmax.f32 %v30, 0.0
    %v39 = vmax.f32 %v31, 0.0
    %v40 = vmax.f32 %v32, 0.0
    %v41 = vmax.f32 %v33, 0.0
    %v42 = vmax.f32 %v34, 0.0
    %v43 = vmax.f32 %v35, 0.0
    %v44 = vld [vmem:[%s0] sm:$0xff]
    %v45 = vld [vmem:[%s0 + $0x8] sm:$0xff]
    %47 = vset.pattern.permute.xlu0 0
    %48 = vperm.xlu0 %47, %v44
    %v49 = vpop.permute.xlu0 %48
    %52 = vset.pattern.permute.xlu0 0
    %53 = vperm.xlu0 %52, %v45
    %v54 = vpop.permute.xlu0 %53
    %v56 = vmul.f32 %v36, %v49
    %v57 = vmul.f32 %v37, %v49
    %v58 = vmul.f32 %v38, %v49
    %v59 = vmul.f32 %v39, %v49
    %v60 = vmul.f32 %v40, %v54
    %v61 = vmul.f32 %v41, %v54
    %v62 = vmul.f32 %v42, %v54
    %v63 = vmul.f32 %v43, %v54
    %64 = vst [vmem:[#allocation5] sm:$0xff] %v56
    %65 = vst [vmem:[#allocation5 + $0x8] sm:$0xff] %v57
    %66 = vst [vmem:[#allocation5 + $0x10] sm:$0xff] %v58
    %67 = vst [vmem:[#allocation5 + $0x18] sm:$0xff] %v59
    %68 = vst [vmem:[#allocation5 + $0x20] sm:$0xff] %v60
    %69 = vst [vmem:[#allocation5 + $0x28] sm:$0xff] %v61
    %70 = vst [vmem:[#allocation5 + $0x30] sm:$0xff] %v62
    %71 = vst [vmem:[#allocation5 + $0x38] sm:$0xff] %v63
    // Predicated region
    $region14: #{tpu_custom_call.1} parent=1 // pred_check
      _
    $region15: #{tpu_custom_call.1} parent=1 // pred_check_branch
      %73 = sbr.rel (0) target = $region17
    $region16: #{tpu_custom_call.1} parent=1 // pred_region
      %75 = vsyncadd [#allocation4], 0
      %s76 = sshll.u32 [#allocation5], 4
      %s77 = int_to_ptr.vmem [resolvable:$true] %s76
      %s78 = sshll.u32 %s2, 4
      %s79 = int_to_ptr.hbm [resolvable:$true] %s78
      %84 = dma.vmem_to_hbm [thread:$0]  %s77, 1024, %s79, [#allocation4], 512, 512, 32
    $region17: #{tpu_custom_call.1} parent=1 // pred_fallthru
      _
    // Predicated region
    $region18: #{tpu_custom_call.1} parent=1 // pred_check
      _
    $region19: #{tpu_custom_call.1} parent=1 // pred_check_branch
      %86 = sbr.rel (0) target = $region21
    $region20: #{tpu_custom_call.1} parent=1 // pred_region
      %88 = dma.done [#allocation4], 1024
    $region21: #{tpu_custom_call.1} parent=1 // pred_fallthru
      _
    %89 = vsyncpa [#allocation3], 1
    %90 = vsyncpa [#allocation4], 1

</llo_original>
